<compile_context>
chip_gen: v6e
topology: v6e:2x2x1
jax: 0.10.0
libtpu: 0.0.40
codegen_flags: <defaults>
</compile_context>

<pallas_src>
import functools

import jax
import jax.numpy as jnp
from jax.experimental import pallas as pl
from jax.experimental.pallas import tpu as pltpu


# --------------------------------------------------------------------------- #
# Kernels
# --------------------------------------------------------------------------- #
def _ffn_kernel_resident(x_ref, w1_ref, b1_ref, w2_ref, b2_ref, o_ref):
    # grid = (m_tiles,).  Whole (padded) W1/W2 resident in VMEM.
    x = x_ref[...].astype(w1_ref.dtype)
    h = jnp.dot(x, w1_ref[...], preferred_element_type=jnp.float32)
    h = jnp.maximum(h + b1_ref[...], 0.0)
    out = jnp.dot(h.astype(w2_ref.dtype), w2_ref[...],
                  preferred_element_type=jnp.float32)
    o_ref[...] = (out + b2_ref[...]).astype(o_ref.dtype)


def _ffn_kernel_streamed(x_ref, w1_ref, b1_ref, w2_ref, b2_ref, o_ref, *scratch):
    # grid = (m_tiles, k_tiles); axis 1 streams d_ff slabs of W1/W2.
    # acc is an f32 VMEM scratch when the output dtype is not f32; otherwise we
    # accumulate directly into the (k-resident) output block and save the
    # zero-init + extra read/write passes.
    acc_ref = scratch[0] if scratch else o_ref
    k = pl.program_id(1)

    x = x_ref[...].astype(w1_ref.dtype)
    h = jnp.dot(x, w1_ref[...], preferred_element_type=jnp.float32)
    h = jnp.maximum(h + b1_ref[...], 0.0)
    partial = jnp.dot(h.astype(w2_ref.dtype), w2_ref[...],
                      preferred_element_type=jnp.float32)

    @pl.when(k == 0)
    def _():
        acc_ref[...] = partial          # direct store: no zero-init pass

    @pl.when(k > 0)
    def _():
        acc_ref[...] += partial

    @pl.when(k == pl.num_programs(1) - 1)
    def _():
        o_ref[...] = (acc_ref[...] + b2_ref[...]).astype(o_ref.dtype)


# --------------------------------------------------------------------------- #
# Wrapper
# --------------------------------------------------------------------------- #
def _round_up(n, m):
    return (n + m - 1) // m * m


def _cdiv(a, b):
    return -(-a // b)


def _vmem_capacity_bytes():
    try:
        return int(pltpu.get_tpu_info().vmem_capacity_bytes)
    except Exception:
        return 64 * 1024 * 1024  # conservative fallback (true on v7x)


def _single_buffer_supported():
    # Probe whether this JAX supports BlockSpec(pipeline_mode=pl.Buffered(1)).
    try:
        pl.BlockSpec((8, 128), lambda i: (0, 0), pipeline_mode=pl.Buffered(1))
        return True
    except Exception:
        return False


def _packing(itemsize):
    return {2: 16, 1: 32}.get(itemsize, 8)


@functools.partial(jax.jit,
                   static_argnames=("tm", "tkf", "compute_dtype", "force_path"))
def position_wise_ffn(x, w1, b1, w2, b2, *, tm=None, tkf=None,
                      compute_dtype=jnp.bfloat16, force_path=None):
    """x: (batch, seq, d_model) -> (batch, seq, d_model).

    tm:  token-tile size (rows per MXU pass); None -> generation-tuned default.
    tkf: d_ff tile for the streamed path;     None -> generation-tuned default.
    compute_dtype: dtype fed to the MXU (accumulation is always f32).
    force_path: None (auto) | "resident" | "streamed"  (mostly for testing).
    """
    batch, seq, d_model = x.shape
    d_ff = w1.shape[1]
    m = batch * seq
    out_dtype = x.dtype

    ci = jnp.dtype(compute_dtype).itemsize
    xi = jnp.dtype(x.dtype).itemsize
    oi = jnp.dtype(out_dtype).itemsize
    sublane = max(_packing(ci), _packing(xi), _packing(oi))

    vmem_cap = _vmem_capacity_bytes()
    vmem_budget = int(vmem_cap * 0.70)        # leave compiler-scratch headroom
    single_buf_ok = _single_buffer_supported()

    # Generation-tuned tile defaults keyed off VMEM capacity
    # (v7x ~64 MiB/TC, roofline knee ~310 FLOP/B; v5e/v6e 128 MiB, knee ~650).
    if tm is None:
        tm = 512 if vmem_cap <= (80 << 20) else 768
    if tkf is None:
        tkf = 1024 if vmem_cap <= (80 << 20) else 1536

    # ---- token (M) tiling --------------------------------------------------
    m_rounded = _round_up(m, sublane)
    n_m_tiles = _cdiv(m_rounded, tm)
    if m_rounded >= 512:
        n_m_tiles = max(n_m_tiles, 2)         # keep both v7x TensorCores busy
    tm_eff = _round_up(_cdiv(m_rounded, n_m_tiles), sublane)

    # ---- feature padding ---------------------------------------------------
    dmp = _round_up(d_model, 128)
    dffp = _round_up(d_ff, 128)

    # ---- VMEM footprint models ---------------------------------------------
    def resident_fp(w_bufs):
        return (2 * tm_eff * dmp * (xi + oi)        # x + out tiles, dbl-buffered
                + w_bufs * 2 * dmp * dffp * ci      # W1 + W2 resident
                + tm_eff * dffp * 4                 # f32 ReLU intermediate
                + 4 * (dffp + dmp) * 4)             # biases

    def streamed_fp(tm_, tkf_):
        return (2 * tm_ * dmp * (xi + oi)
                + 2 * 2 * dmp * tkf_ * ci           # W1 + W2 slabs, dbl-buffered
                + tm_ * tkf_ * 4                    # f32 ReLU intermediate
                + tm_ * dmp * 4                     # f32 accumulator
                + 4 * (tkf_ + dmp) * 4)

    # ---- path selection ----------------------------------------------------
    weight_bufs = 2
    if force_path == "resident":
        resident = True
        if single_buf_ok and resident_fp(2) > vmem_budget:
            weight_bufs = 1
    elif force_path == "streamed":
        resident = False
    else:
        if resident_fp(2) <= vmem_budget:
            resident, weight_bufs = True, 2
        elif single_buf_ok and resident_fp(1) <= vmem_budget:
            resident, weight_bufs = True, 1
        else:
            resident = False

    if resident:
        tkf_eff = dffp
    else:
        # Pick tkf so it divides padded d_ff tightly (avoids up to tkf-128
        # wasted columns of MXU work / weight DMA), shrinking if VMEM-tight.
        tkf_target = max(128, min(tkf, dffp))
        while True:
            n_k = _cdiv(dffp, tkf_target)
            tkf_eff = _round_up(_cdiv(dffp, n_k), 128)
            if streamed_fp(tm_eff, tkf_eff) <= vmem_budget or tkf_target <= 128:
                break
            tkf_target //= 2
        while streamed_fp(tm_eff, tkf_eff) > vmem_budget and tm_eff > sublane:
            tm_eff = max(sublane, _round_up(tm_eff // 2, sublane))
        dffp = _round_up(dffp, tkf_eff)

    mp = _round_up(m, tm_eff)
    num_m_tiles = mp // tm_eff
    grid = (num_m_tiles,) if resident else (num_m_tiles, dffp // tkf_eff)

    # ---- operand prep (padding is semantics-preserving) ---------------------
    # x keeps its original dtype; it is cast to the compute dtype in-kernel.
    x2d = x.reshape(m, d_model)
    if mp != m or dmp != d_model:
        x2d = jnp.pad(x2d, ((0, mp - m), (0, dmp - d_model)))

    # Weights are static per layer: in a full model do this once and reuse.
    w1p = jnp.pad(w1.astype(compute_dtype), ((0, dmp - d_model), (0, dffp - d_ff)))
    w2p = jnp.pad(w2.astype(compute_dtype), ((0, dffp - d_ff), (0, dmp - d_model)))
    b1p = jnp.pad(b1.astype(jnp.float32), (0, dffp - d_ff)).reshape(1, dffp)
    b2p = jnp.pad(b2.astype(jnp.float32), (0, dmp - d_model)).reshape(1, dmp)

    # ---- specs ---------------------------------------------------------------
    if resident:
        if weight_bufs == 1:
            def w_spec(shape):
                return pl.BlockSpec(shape, lambda i: (0, 0),
                                    pipeline_mode=pl.Buffered(1))
        else:
            def w_spec(shape):
                return pl.BlockSpec(shape, lambda i: (0, 0))
        in_specs = [
            pl.BlockSpec((tm_eff, dmp), lambda i: (i, 0)),     # x tile
            w_spec((dmp, dffp)),                               # W1 (resident)
            pl.BlockSpec((1, dffp), lambda i: (0, 0)),         # b1
            w_spec((dffp, dmp)),                               # W2 (resident)
            pl.BlockSpec((1, dmp), lambda i: (0, 0)),          # b2
        ]
        out_spec = pl.BlockSpec((tm_eff, dmp), lambda i: (i, 0))
        kernel = _ffn_kernel_resident
        scratch_shapes = []
        dim_sem = ("parallel",)
        footprint = resident_fp(weight_bufs)
    else:
        in_specs = [
            pl.BlockSpec((tm_eff, dmp), lambda i, k: (i, 0)),   # x tile
            pl.BlockSpec((dmp, tkf_eff), lambda i, k: (0, k)),  # W1 slab
            pl.BlockSpec((1, tkf_eff), lambda i, k: (0, k)),    # b1 slab
            pl.BlockSpec((tkf_eff, dmp), lambda i, k: (k, 0)),  # W2 slab
            pl.BlockSpec((1, dmp), lambda i, k: (0, 0)),        # b2
        ]
        out_spec = pl.BlockSpec((tm_eff, dmp), lambda i, k: (i, 0))
        kernel = _ffn_kernel_streamed
        # f32 output -> accumulate directly into the resident o_ref block.
        need_scratch = jnp.dtype(out_dtype) != jnp.dtype(jnp.float32)
        scratch_shapes = ([pltpu.VMEM((tm_eff, dmp), jnp.float32)]
                          if need_scratch else [])
        dim_sem = ("parallel", "arbitrary")
        footprint = streamed_fp(tm_eff, tkf_eff)

    # VMEM limit: actual footprint + margin, capped below physical capacity.
    vmem_limit = min(int(vmem_cap * 0.90), int(footprint) + (8 << 20))
    vmem_limit = max(vmem_limit, 16 << 20)

    flops = 2 * 2 * mp * dmp * dffp   # two matmuls
    w_bytes = (w1p.size + w2p.size) * ci
    bytes_accessed = (x2d.size * xi
                      + w_bytes * (1 if resident else num_m_tiles)
                      + (b1p.size + b2p.size) * 4
                      + mp * dmp * oi)

    out2d = pl.pallas_call(
        kernel,
        out_shape=jax.ShapeDtypeStruct((mp, dmp), out_dtype),
        grid_spec=pltpu.PrefetchScalarGridSpec(
            num_scalar_prefetch=0,
            grid=grid,
            in_specs=in_specs,
            out_specs=out_spec,
            scratch_shapes=scratch_shapes),
        compiler_params=pltpu.CompilerParams(
            dimension_semantics=dim_sem,
            vmem_limit_bytes=int(vmem_limit)),
        cost_estimate=pl.CostEstimate(flops=int(flops), transcendentals=0,
                                      bytes_accessed=int(bytes_accessed)),
    )(x2d, w1p, b1p, w2p, b2p)

    return out2d[:m, :d_model].reshape(batch, seq, d_model)


def init_params(key, d_model, d_ff, dtype=jnp.float32):
    """Deterministic init mirroring nn.Linear defaults (uniform +/- 1/sqrt(fan_in))."""
    k1, k2, k3, k4 = jax.random.split(key, 4)
    lim1 = 1.0 / jnp.sqrt(d_model)
    lim2 = 1.0 / jnp.sqrt(d_ff)
    # stored pre-transposed: (in, out)
    w1 = jax.random.uniform(k1, (d_model, d_ff), dtype, -lim1, lim1)
    b1 = jax.random.uniform(k2, (d_ff,), dtype, -lim1, lim1)
    w2 = jax.random.uniform(k3, (d_ff, d_model), dtype, -lim2, lim2)
    b2 = jax.random.uniform(k4, (d_model,), dtype, -lim2, lim2)
    return w1, b1, w2, b2


if __name__ == "__main__":
    batch, seq, d_model, d_ff = 2, 8, 32, 256

    key = jax.random.PRNGKey(0)
    kx, kp = jax.random.split(key)
    x = jax.random.normal(kx, (batch, seq, d_model), jnp.float32)
    w1, b1, w2, b2 = init_params(kp, d_model, d_ff)

    # Pure-JAX reference.
    ref = jnp.maximum(x @ w1 + b1, 0.0) @ w2 + b2

    # 1) f32 compute, auto path (weights-resident at this size): tight match.
    out_f32 = jax.block_until_ready(
        position_wise_ffn(x, w1, b1, w2, b2, compute_dtype=jnp.float32))
    assert out_f32.shape == (batch, seq, d_model)
    assert jnp.allclose(out_f32, ref, atol=1e-5, rtol=1e-5)

    # 2) default bf16 MXU path (f32 accumulation): looser tolerance.
    out_bf16 = jax.block_until_ready(position_wise_ffn(x, w1, b1, w2, b2))
    assert out_bf16.shape == (batch, seq, d_model)
    assert jnp.allclose(out_bf16, ref, atol=5e-2, rtol=5e-2)

    # 3) forced streamed path (2 d_ff slabs), f32 out -> accumulates in o_ref.
    out_s = jax.block_until_ready(
        position_wise_ffn(x, w1, b1, w2, b2, tkf=128,
                          compute_dtype=jnp.float32, force_path="streamed"))
    assert jnp.allclose(out_s, ref, atol=1e-5, rtol=1e-5)

    # 4) forced streamed path with bf16 activations -> uses the f32 acc scratch.
    x_bf16 = x.astype(jnp.bfloat16)
    out_sb = jax.block_until_ready(
        position_wise_ffn(x_bf16, w1, b1, w2, b2, tkf=128,
                          force_path="streamed"))
    assert jnp.allclose(out_sb.astype(jnp.float32), ref, atol=5e-2, rtol=5e-2)

    print("KERNEL_OK")
</pallas_src>

<mosaic_0001>
module attributes {stable_mosaic.version = 11 : i64} {
  func.func @_ffn_kernel_resident(%arg0: i32, %arg1: memref<16x128xf32, #tpu.memory_space<vmem>>, %arg2: memref<128x256xf32, #tpu.memory_space<vmem>>, %arg3: memref<1x256xf32, #tpu.memory_space<vmem>>, %arg4: memref<256x128xf32, #tpu.memory_space<vmem>>, %arg5: memref<1x128xf32, #tpu.memory_space<vmem>>, %arg6: memref<16x128xf32, #tpu.memory_space<vmem>>) attributes {dimension_semantics = [#tpu.dimension_semantics<parallel>], iteration_bounds = array<i64: 1>, scalar_prefetch = 0 : i64, scratch_operands = 0 : i64, tpu.core_type = #tpu.core_type<tc>, window_params = [{transform_indices = @transform_0, window_bounds = array<i64: 16, 128>}, {pipeline_mode = #tpu.pipeline_mode<synchronous>, transform_indices = @transform_1, window_bounds = array<i64: 128, 256>}, {pipeline_mode = #tpu.pipeline_mode<synchronous>, transform_indices = @transform_2, window_bounds = array<i64: 1, 256>}, {pipeline_mode = #tpu.pipeline_mode<synchronous>, transform_indices = @transform_3, window_bounds = array<i64: 256, 128>}, {pipeline_mode = #tpu.pipeline_mode<synchronous>, transform_indices = @transform_4, window_bounds = array<i64: 1, 128>}, {transform_indices = @transform_5, window_bounds = array<i64: 16, 128>}]} {
    %c0 = arith.constant 0 : index
    %c0_0 = arith.constant 0 : index
    %0 = vector.load %arg1[%c0, %c0_0] : memref<16x128xf32, #tpu.memory_space<vmem>>, vector<16x128xf32>
    %c0_1 = arith.constant 0 : index
    %c0_2 = arith.constant 0 : index
    %1 = vector.load %arg2[%c0_1, %c0_2] : memref<128x256xf32, #tpu.memory_space<vmem>>, vector<128x256xf32>
    %cst = arith.constant dense<0.000000e+00> : vector<16x256xf32>
    %2 = tpu.matmul %0, %1, %cst {dimension_numbers = #tpu.dot_dimension_numbers<[1], [0], [0], [1], [0, 0, 1, 1], [], []>} : vector<16x128xf32>, vector<128x256xf32>, vector<16x256xf32> -> vector<16x256xf32>
    %c0_3 = arith.constant 0 : index
    %c0_4 = arith.constant 0 : index
    %3 = vector.load %arg3[%c0_3, %c0_4] : memref<1x256xf32, #tpu.memory_space<vmem>>, vector<1x256xf32>
    %4 = vector.broadcast %3 : vector<1x256xf32> to vector<16x256xf32>
    %5 = arith.addf %2, %4 : vector<16x256xf32>
    %cst_5 = arith.constant 0.000000e+00 : f32
    %6 = vector.broadcast %cst_5 : f32 to vector<16x256xf32>
    %7 = arith.maximumf %5, %6 : vector<16x256xf32>
    %c0_6 = arith.constant 0 : index
    %c0_7 = arith.constant 0 : index
    %8 = vector.load %arg4[%c0_6, %c0_7] : memref<256x128xf32, #tpu.memory_space<vmem>>, vector<256x128xf32>
    %cst_8 = arith.constant dense<0.000000e+00> : vector<16x128xf32>
    %9 = tpu.matmul %7, %8, %cst_8 {dimension_numbers = #tpu.dot_dimension_numbers<[1], [0], [0], [1], [0, 0, 1, 1], [], []>} : vector<16x256xf32>, vector<256x128xf32>, vector<16x128xf32> -> vector<16x128xf32>
    %c0_9 = arith.constant 0 : index
    %c0_10 = arith.constant 0 : index
    %10 = vector.load %arg5[%c0_9, %c0_10] : memref<1x128xf32, #tpu.memory_space<vmem>>, vector<1x128xf32>
    %11 = vector.broadcast %10 : vector<1x128xf32> to vector<16x128xf32>
    %12 = arith.addf %9, %11 : vector<16x128xf32>
    %c0_11 = arith.constant 0 : index
    %c0_12 = arith.constant 0 : index
    %13 = vector.load %arg6[%c0_11, %c0_12] : memref<16x128xf32, #tpu.memory_space<vmem>>, vector<16x128xf32>
    tpu.vector_store %arg6[%c0_11, %c0_12], %12 {strides = array<i32>} : memref<16x128xf32, #tpu.memory_space<vmem>>, vector<16x128xf32>,
    return
  }
  func.func @transform_0(%arg0: i32) -> (i32, i32) {
    %c0_i32 = arith.constant 0 : i32
    %c0_i32_0 = arith.constant 0 : i32
    return %arg0, %c0_i32 : i32, i32
  }
  func.func @transform_1(%arg0: i32) -> (i32, i32) {
    %c0_i32 = arith.constant 0 : i32
    %c0_i32_0 = arith.constant 0 : i32
    %c0_i32_1 = arith.constant 0 : i32
    return %c0_i32, %c0_i32_0 : i32, i32
  }
  func.func @transform_2(%arg0: i32) -> (i32, i32) {
    %c0_i32 = arith.constant 0 : i32
    %c0_i32_0 = arith.constant 0 : i32
    %c0_i32_1 = arith.constant 0 : i32
    return %c0_i32, %c0_i32_0 : i32, i32
  }
  func.func @transform_3(%arg0: i32) -> (i32, i32) {
    %c0_i32 = arith.constant 0 : i32
    %c0_i32_0 = arith.constant 0 : i32
    %c0_i32_1 = arith.constant 0 : i32
    return %c0_i32, %c0_i32_0 : i32, i32
  }
  func.func @transform_4(%arg0: i32) -> (i32, i32) {
    %c0_i32 = arith.constant 0 : i32
    %c0_i32_0 = arith.constant 0 : i32
    %c0_i32_1 = arith.constant 0 : i32
    return %c0_i32, %c0_i32_0 : i32, i32
  }
  func.func @transform_5(%arg0: i32) -> (i32, i32) {
    %c0_i32 = arith.constant 0 : i32
    %c0_i32_0 = arith.constant 0 : i32
    return %arg0, %c0_i32 : i32, i32
  }
}

</mosaic_0001>

<llo_original>
// kernel: position_wise_ffn.1
$region0: #{position_wise_ffn.1}
  #allocation0 [shape = 'u32[]', space=smem, size = 0x4, offset = 0x4, fixed_abs, tag = 'smem constant byte address 0x4 - core index']
  #allocation1 [shape = 'u32[144,128]{1,0:T(1,128)}', space=vmem, size = 0x12000, scoped, tag = 'internal scratch']
  %s0 = inlined_call_operand.vmem [shape: f32[16,128], index: 0, kind: input, shape index: {}]
  %s1 = inlined_call_operand.vmem [shape: f32[128,256], index: 1, kind: input, shape index: {}]
  %s2 = inlined_call_operand.vmem [shape: f32[1,256], index: 2, kind: input, shape index: {}]
  %s3 = inlined_call_operand.vmem [shape: f32[256,128], index: 3, kind: input, shape index: {}]
  %s4 = inlined_call_operand.vmem [shape: f32[1,128], index: 4, kind: input, shape index: {}]
  %s5 = inlined_call_operand.vmem [shape: f32[16,128], index: 5, kind: output, shape index: {}]
  %s6 = sld [smem:[#allocation0]]
  $region30: #{position_wise_ffn.1} parent=0
    _
  %s8 = ssub.s32 1, %s6
  %s9 = scalar_select 0, %s8, %s6
  // Predicated region
  $region2: #{position_wise_ffn.1} parent=0 // pred_check
    _
  $region3: #{position_wise_ffn.1} parent=0 // pred_check_branch
    %11 = sbr.rel (0) target = $region5
  $region4: #{position_wise_ffn.1} parent=0 // pred_region
    _
  $region5: #{position_wise_ffn.1} parent=0 // pred_fallthru
    _
  // Predicated region
  $region6: #{position_wise_ffn.1} parent=0 // pred_check
    _
  $region7: #{position_wise_ffn.1} parent=0 // pred_check_branch
    %13 = sbr.rel (0) target = $region9
  $region8: #{position_wise_ffn.1} parent=0 // pred_region
    _
  $region9: #{position_wise_ffn.1} parent=0 // pred_fallthru
    _
  // Predicated region
  $region10: #{position_wise_ffn.1} parent=0 // pred_check
    _
  $region11: #{position_wise_ffn.1} parent=0 // pred_check_branch
    %15 = sbr.rel (0) target = $region13
  $region12: #{position_wise_ffn.1} parent=0 // pred_region
    _
  $region13: #{position_wise_ffn.1} parent=0 // pred_fallthru
    _
  // Predicated region
  $region14: #{position_wise_ffn.1} parent=0 // pred_check
    _
  $region15: #{position_wise_ffn.1} parent=0 // pred_check_branch
    %17 = sbr.rel (0) target = $region17
  $region16: #{position_wise_ffn.1} parent=0 // pred_region
    _
  $region17: #{position_wise_ffn.1} parent=0 // pred_fallthru
    _
  // Predicated region
  $region18: #{position_wise_ffn.1} parent=0 // pred_check
    _
  $region19: #{position_wise_ffn.1} parent=0 // pred_check_branch
    %19 = sbr.rel (0) target = $region21
  $region20: #{position_wise_ffn.1} parent=0 // pred_region
    _
  $region21: #{position_wise_ffn.1} parent=0 // pred_fallthru
    _
  %v20 = vld [vmem:[%s0] sm:$0xff]
  %v21 = vld [vmem:[%s0 + $0x8] sm:$0xff]
  %v22 = vld [vmem:[%s1] sm:$0xff]
  %v23 = vld [vmem:[%s1 + $0x8] sm:$0xff]
  %v24 = vld [vmem:[%s1 + $0x10] sm:$0xff]
  %v25 = vld [vmem:[%s1 + $0x18] sm:$0xff]
  %v26 = vld [vmem:[%s1 + $0x20] sm:$0xff]
  %v27 = vld [vmem:[%s1 + $0x28] sm:$0xff]
  %v28 = vld [vmem:[%s1 + $0x30] sm:$0xff]
  %v29 = vld [vmem:[%s1 + $0x38] sm:$0xff]
  %v30 = vld [vmem:[%s1 + $0x40] sm:$0xff]
  %v31 = vld [vmem:[%s1 + $0x48] sm:$0xff]
  %v32 = vld [vmem:[%s1 + $0x50] sm:$0xff]
  %v33 = vld [vmem:[%s1 + $0x58] sm:$0xff]
  %v34 = vld [vmem:[%s1 + $0x60] sm:$0xff]
  %v35 = vld [vmem:[%s1 + $0x68] sm:$0xff]
  %v36 = vld [vmem:[%s1 + $0x70] sm:$0xff]
  %v37 = vld [vmem:[%s1 + $0x78] sm:$0xff]
  %v38 = vld [vmem:[%s1 + $0x80] sm:$0xff]
  %v39 = vld [vmem:[%s1 + $0x88] sm:$0xff]
  %v40 = vld [vmem:[%s1 + $0x90] sm:$0xff]
  %v41 = vld [vmem:[%s1 + $0x98] sm:$0xff]
  %v42 = vld [vmem:[%s1 + $0xa0] sm:$0xff]
  %v43 = vld [vmem:[%s1 + $0xa8] sm:$0xff]
  %v44 = vld [vmem:[%s1 + $0xb0] sm:$0xff]
  %v45 = vld [vmem:[%s1 + $0xb8] sm:$0xff]
  %v46 = vld [vmem:[%s1 + $0xc0] sm:$0xff]
  %v47 = vld [vmem:[%s1 + $0xc8] sm:$0xff]
  %v48 = vld [vmem:[%s1 + $0xd0] sm:$0xff]
  %v49 = vld [vmem:[%s1 + $0xd8] sm:$0xff]
  %v50 = vld [vmem:[%s1 + $0xe0] sm:$0xff]
  %v51 = vld [vmem:[%s1 + $0xe8] sm:$0xff]
  %v52 = vld [vmem:[%s1 + $0xf0] sm:$0xff]
  %v53 = vld [vmem:[%s1 + $0xf8] sm:$0xff]
  %v54 = vld [vmem:[%s2] sm:$0x3]
  %v56 = vlaneseq
  %v57 = vshrl.u32 %v56, 7
  %v58 = vsub.s32 0, %v57
  %v59 = vrot.slane %v54, %v58
  %v60 = vlaneseq
  %v61 = vshrl.u32 %v60, 7
  %v62 = vsub.s32 1, %v61
  %v63 = vrot.slane %v54, %v62
  %66 = vmatprep.subr.mxu0 %v53
  %67 = vmatpush1.msra.mxu0 %v52
  %68 = vmatprep.subr.mxu0 %v51
  %69 = vmatpush1.msra.mxu0 %v50
  %70 = vmatprep.subr.mxu0 %v49
  %71 = vmatpush1.msra.mxu0 %v48
  %72 = vmatprep.subr.mxu0 %v47
  %73 = vmatpush1.msra.mxu0 %v46
  %74 = vmatprep.subr.mxu0 %v45
  %75 = vmatpush1.msra.mxu0 %v44
  %76 = vmatprep.subr.mxu0 %v43
  %77 = vmatpush1.msra.mxu0 %v42
  %78 = vmatprep.subr.mxu0 %v41
  %79 = vmatpush1.msra.mxu0 %v40
  %80 = vmatprep.subr.mxu0 %v39
  %81 = vmatpush1.msra.mxu0 %v38
  %82 = vmatprep.subr.mxu0 %v37
  %83 = vmatpush1.msra.mxu0 %v36
  %84 = vmatprep.subr.mxu0 %v35
  %85 = vmatpush1.msra.mxu0 %v34
  %86 = vmatprep.subr.mxu0 %v33
  %87 = vmatpush1.msra.mxu0 %v32
  %88 = vmatprep.subr.mxu0 %v31
  %89 = vmatpush1.msra.mxu0 %v30
  %90 = vmatprep.subr.mxu0 %v29
  %91 = vmatpush1.msra.mxu0 %v28
  %92 = vmatprep.subr.mxu0 %v27
  %93 = vmatpush1.msra.mxu0 %v26
  %94 = vmatprep.subr.mxu0 %v25
  %95 = vmatpush1.msra.mxu0 %v24
  %96 = vmatprep.subr.mxu0 %v23
  %97 = vmatpush1.msra.mxu0 %v22
  %98 = vmatprep.subr.mxu0 0.0
  %99 = vmatpush2.msra.mxu0 0.0
  %100 = vmatprep.subr.mxu0 0.0
  %101 = vmatpush2.msra.mxu0 0.0
  %102 = vmatprep.subr.mxu0 0.0
  %103 = vmatpush2.msra.mxu0 0.0
  %104 = vmatprep.subr.mxu0 0.0
  %105 = vmatpush2.msra.mxu0 0.0
  %106 = vmatprep.subr.mxu0 0.0
  %107 = vmatpush2.msra.mxu0 0.0
  %108 = vmatprep.subr.mxu0 0.0
  %109 = vmatpush2.msra.mxu0 0.0
  %110 = vmatprep.subr.mxu0 0.0
  %111 = vmatpush2.msra.mxu0 0.0
  %112 = vmatprep.subr.mxu0 0.0
  %113 = vmatpush2.msra.mxu0 0.0
  %114 = vmatprep.subr.mxu0 0.0
  %115 = vmatpush2.msra.mxu0 0.0
  %116 = vmatprep.subr.mxu0 0.0
  %117 = vmatpush2.msra.mxu0 0.0
  %118 = vmatprep.subr.mxu0 0.0
  %119 = vmatpush2.msra.mxu0 0.0
  %120 = vmatprep.subr.mxu0 0.0
  %121 = vmatpush2.msra.mxu0 0.0
  %122 = vmatprep.subr.mxu0 0.0
  %123 = vmatpush2.msra.mxu0 0.0
  %124 = vmatprep.subr.mxu0 0.0
  %125 = vmatpush2.msra.mxu0 0.0
  %126 = vmatprep.subr.mxu0 0.0
  %127 = vmatpush2.msra.mxu0 0.0
  %128 = vmatprep.subr.mxu0 0.0
  %129 = vmatpush2.msra.mxu0 0.0
  %130 = vmatprep.mubr.f32.mxu0 0.0
  %131 = vmatmul.mubr.f32.gmra.mxu0 %v20
  %v132 = vpop.f32.mrf.mxu0
  %v133 = vadd.f32 %v59, %v132
  %v134 = vpop.f32.mrf.mxu0
  %v135 = vadd.f32 %v63, %v134
  %136 = vmatprep.mubr.f32.mxu0 0.0
  %137 = vmatmul.mubr.f32.gmra.mxu0 %v21
  %v138 = vpop.f32.mrf.mxu0
  %v139 = vadd.f32 %v59, %v138
  %v140 = vpop.f32.mrf.mxu0
  %v141 = vadd.f32 %v63, %v140
  %142 = vdwg.mxu0
  %v143 = vmax.f32 %v133, 0.0
  %v144 = vmax.f32 %v135, 0.0
  %v145 = vmax.f32 %v139, 0.0
  %v146 = vmax.f32 %v141, 0.0
  %v147 = vld [vmem:[%s3] sm:$0xff]
  %v148 = vld [vmem:[%s3 + $0x8] sm:$0xff]
  %v149 = vld [vmem:[%s3 + $0x10] sm:$0xff]
  %v150 = vld [vmem:[%s3 + $0x18] sm:$0xff]
  %v151 = vld [vmem:[%s3 + $0x20] sm:$0xff]
  %v152 = vld [vmem:[%s3 + $0x28] sm:$0xff]
  %v153 = vld [vmem:[%s3 + $0x30] sm:$0xff]
  %v154 = vld [vmem:[%s3 + $0x38] sm:$0xff]
  %v155 = vld [vmem:[%s3 + $0x40] sm:$0xff]
  %v156 = vld [vmem:[%s3 + $0x48] sm:$0xff]
  %v157 = vld [vmem:[%s3 + $0x50] sm:$0xff]
  %v158 = vld [vmem:[%s3 + $0x58] sm:$0xff]
  %v159 = vld [vmem:[%s3 + $0x60] sm:$0xff]
  %v160 = vld [vmem:[%s3 + $0x68] sm:$0xff]
  %v161 = vld [vmem:[%s3 + $0x70] sm:$0xff]
  %v162 = vld [vmem:[%s3 + $0x78] sm:$0xff]
  %v163 = vld [vmem:[%s3 + $0x80] sm:$0xff]
  %v164 = vld [vmem:[%s3 + $0x88] sm:$0xff]
  %v165 = vld [vmem:[%s3 + $0x90] sm:$0xff]
  %v166 = vld [vmem:[%s3 + $0x98] sm:$0xff]
  %v167 = vld [vmem:[%s3 + $0xa0] sm:$0xff]
  %v168 = vld [vmem:[%s3 + $0xa8] sm:$0xff]
  %v169 = vld [vmem:[%s3 + $0xb0] sm:$0xff]
  %v170 = vld [vmem:[%s3 + $0xb8] sm:$0xff]
  %v171 = vld [vmem:[%s3 + $0xc0] sm:$0xff]
  %v172 = vld [vmem:[%s3 + $0xc8] sm:$0xff]
  %v173 = vld [vmem:[%s3 + $0xd0] sm:$0xff]
  %v174 = vld [vmem:[%s3 + $0xd8] sm:$0xff]
  %v175 = vld [vmem:[%s3 + $0xe0] sm:$0xff]
  %v176 = vld [vmem:[%s3 + $0xe8] sm:$0xff]
  %v177 = vld [vmem:[%s3 + $0xf0] sm:$0xff]
  %v178 = vld [vmem:[%s3 + $0xf8] sm:$0xff]
  %v179 = vld [vmem:[%s4] sm:$0x1]
  %v181 = vlaneseq
  %v182 = vshrl.u32 %v181, 7
  %v183 = vsub.s32 0, %v182
  %v184 = vrot.slane %v179, %v183
  %186 = vmatprep.subr.mxu0 0.0
  %187 = vmatpush1.msra.mxu0 %v162
  %188 = vmatprep.subr.mxu0 0.0
  %189 = vmatpush1.msra.mxu0 %v161
  %190 = vmatprep.subr.mxu0 0.0
  %191 = vmatpush1.msra.mxu0 %v160
  %192 = vmatprep.subr.mxu0 0.0
  %193 = vmatpush1.msra.mxu0 %v159
  %194 = vmatprep.subr.mxu0 0.0
  %195 = vmatpush1.msra.mxu0 %v158
  %196 = vmatprep.subr.mxu0 0.0
  %197 = vmatpush1.msra.mxu0 %v157
  %198 = vmatprep.subr.mxu0 0.0
  %199 = vmatpush1.msra.mxu0 %v156
  %200 = vmatprep.subr.mxu0 0.0
  %201 = vmatpush1.msra.mxu0 %v155
  %202 = vmatprep.subr.mxu0 0.0
  %203 = vmatpush1.msra.mxu0 %v154
  %204 = vmatprep.subr.mxu0 0.0
  %205 = vmatpush1.msra.mxu0 %v153
  %206 = vmatprep.subr.mxu0 0.0
  %207 = vmatpush1.msra.mxu0 %v152
  %208 = vmatprep.subr.mxu0 0.0
  %209 = vmatpush1.msra.mxu0 %v151
  %210 = vmatprep.subr.mxu0 0.0
  %211 = vmatpush1.msra.mxu0 %v150
  %212 = vmatprep.subr.mxu0 0.0
  %213 = vmatpush1.msra.mxu0 %v149
  %214 = vmatprep.subr.mxu0 0.0
  %215 = vmatpush1.msra.mxu0 %v148
  %216 = vmatprep.subr.mxu0 0.0
  %217 = vmatpush1.msra.mxu0 %v147
  %218 = vmatprep.subr.mxu0 0.0
  %219 = vmatpush2.msra.mxu0 %v178
  %220 = vmatprep.subr.mxu0 0.0
  %221 = vmatpush2.msra.mxu0 %v177
  %222 = vmatprep.subr.mxu0 0.0
  %223 = vmatpush2.msra.mxu0 %v176
  %224 = vmatprep.subr.mxu0 0.0
  %225 = vmatpush2.msra.mxu0 %v175
  %226 = vmatprep.subr.mxu0 0.0
  %227 = vmatpush2.msra.mxu0 %v174
  %228 = vmatprep.subr.mxu0 0.0
  %229 = vmatpush2.msra.mxu0 %v173
  %230 = vmatprep.subr.mxu0 0.0
  %231 = vmatpush2.msra.mxu0 %v172
  %232 = vmatprep.subr.mxu0 0.0
  %233 = vmatpush2.msra.mxu0 %v171
  %234 = vmatprep.subr.mxu0 0.0
  %235 = vmatpush2.msra.mxu0 %v170
  %236 = vmatprep.subr.mxu0 0.0
  %237 = vmatpush2.msra.mxu0 %v169
  %238 = vmatprep.subr.mxu0 0.0
  %239 = vmatpush2.msra.mxu0 %v168
  %240 = vmatprep.subr.mxu0 0.0
  %241 = vmatpush2.msra.mxu0 %v167
  %242 = vmatprep.subr.mxu0 0.0
  %243 = vmatpush2.msra.mxu0 %v166
  %244 = vmatprep.subr.mxu0 0.0
  %245 = vmatpush2.msra.mxu0 %v165
  %246 = vmatprep.subr.mxu0 0.0
  %247 = vmatpush2.msra.mxu0 %v164
  %248 = vmatprep.subr.mxu0 0.0
  %249 = vmatpush2.msra.mxu0 %v163
  %250 = vmatprep.mubr.f32.mxu0 %v144
  %251 = vmatmul.mubr.f32.gmra.mxu0 %v143
  %v252 = vpop.f32.mrf.mxu0
  %v253 = vadd.f32 %v184, %v252
  %v254 = vpop.f32.mrf.mxu0
  %255 = vmatprep.mubr.f32.mxu0 %v146
  %256 = vmatmul.mubr.f32.gmra.mxu0 %v145
  %v257 = vpop.f32.mrf.mxu0
  %v258 = vadd.f32 %v184, %v257
  %v259 = vpop.f32.mrf.mxu0
  %260 = vdwg.mxu0
  %261 = vst [vmem:[%s5] sm:$0xff] %v253
  %262 = vst [vmem:[%s5 + $0x8] sm:$0xff] %v258
  // Predicated region
  $region22: #{position_wise_ffn.1} parent=0 // pred_check
    _
  $region23: #{position_wise_ffn.1} parent=0 // pred_check_branch
    %264 = sbr.rel (0) target = $region25
  $region24: #{position_wise_ffn.1} parent=0 // pred_region
    _
  $region25: #{position_wise_ffn.1} parent=0 // pred_fallthru
    _
  // Predicated region
  $region26: #{position_wise_ffn.1} parent=0 // pred_check
    _
  $region27: #{position_wise_ffn.1} parent=0 // pred_check_branch
    %266 = sbr.rel (0) target = $region29
  $region28: #{position_wise_ffn.1} parent=0 // pred_region
    _
  $region29: #{position_wise_ffn.1} parent=0 // pred_fallthru
    _

</llo_original>
